<compile_context>
chip_gen: v7x
topology: tpu7x:2x2x1
jax: 0.10.0
libtpu: 0.0.40
codegen_flags: <defaults>
</compile_context>

<pallas_src>
import functools

import jax
import jax.numpy as jnp
from jax.experimental import pallas as pl
from jax.experimental.pallas import tpu as pltpu


def _round_up(x, m):
    return (x + m - 1) // m * m


# ---------------------------------------------------------------------------
# Kernel. Grid = (batch tiles, output tiles); output axis is "arbitrary".
# Ref layouts:
#   x / noise1 / noise2 : (TB, C_pad)     f32   (lane axis = flattened (i, j))
#   phase params (x4)   : (1,  C_pad)     f32   (broadcast rows)
#   w                   : (C_pad, TO)     matmul_dtype
#   bias                : (1,  TO)        f32
#   out                 : (TB, TO)        f32
#   phi (scratch)       : (TB, C_pad)     matmul_dtype  (cached across output tiles)
# ---------------------------------------------------------------------------
def _bayes_relukan_kernel(x_ref, n1_ref, n2_ref,
                          low_ref, high_ref, sl_ref, sh_ref,
                          w_ref, b_ref, o_ref, phi_ref,
                          *, r, order, matmul_dtype):
    # Basis stage runs once per batch tile (output tiles reuse the cached phi).
    @pl.when(pl.program_id(1) == 0)
    def _():
        x = x_ref[...]                                              # (TB, C_pad) f32
        x1 = jnp.maximum(x - (low_ref[...] + sl_ref[...] * n1_ref[...]), 0.0)
        x2 = jnp.maximum((high_ref[...] + sh_ref[...] * n2_ref[...]) - x, 0.0)
        p = x1 * x2 * r
        if order != 1:
            q = p
            for _ in range(order - 1):      # unrolled integer power (VALU, no pow)
                q = q * p
            p = q
        phi_ref[...] = (p * p).astype(matmul_dtype)

    # Single fused MXU dot: K = C_pad (dense lanes), f32 accumulate.
    o_ref[...] = jnp.dot(phi_ref[...], w_ref[...],
                         preferred_element_type=jnp.float32) + b_ref[...]


def _vmem_budget_bytes():
    """Per-generation VMEM budget for tile sizing (conservative on v7x)."""
    try:
        cap = int(pltpu.get_tpu_info().vmem_capacity_bytes)
    except Exception:
        cap = 64 * 2**20                    # assume the smallest (v7x) if unknown
    return min(96 * 2**20, max(32 * 2**20, cap // 2 + 12 * 2**20))


# ---------------------------------------------------------------------------
# Wrapper: lane packing, padding, weight flattening, grid / BlockSpecs.
# ---------------------------------------------------------------------------
def bayes_relukan_forward(x, noise1, noise2, params, *, g, k, output_size,
                          r, order=1, matmul_dtype=jnp.bfloat16):
    """x, noise1, noise2: (B, input_size, 1) f32. Returns (B, output_size, 1) f32."""
    B, I, _ = x.shape
    GK = g + k
    O = output_size
    C = I * GK                                   # flattened (i, j) basis axis
    C_pad = _round_up(C, 128)
    O_pad = _round_up(O, 128)
    w_item = jnp.dtype(matmul_dtype).itemsize

    # Output tile: one tile when it fits (weight stays VMEM-resident, no phi
    # reuse across o needed); otherwise the largest 128-multiple divisor <= 512.
    if O_pad <= 512:
        TO = O_pad
    else:
        TO = 512 if O_pad % 512 == 0 else (256 if O_pad % 256 == 0 else 128)

    B8 = _round_up(B, 8)

    def footprint(tb):
        dbl = 2                                            # BlockSpec double-buffering
        return (dbl * (3 * tb * C_pad * 4                  # x / noise1 / noise2
                       + 4 * C_pad * 4                     # phase param rows
                       + C_pad * TO * w_item               # weight tile
                       + TO * 4                            # bias
                       + tb * TO * 4)                      # output tile
                + tb * C_pad * w_item)                     # phi scratch (single copy)

    budget = _vmem_budget_bytes()
    TB = 8
    for cand in (1024, 512, 256, 128, 64, 32, 16, 8):      # largest first
        if footprint(cand) <= budget:
            TB = cand
            break
    TB = min(TB, B8)                                       # don't over-pad tiny batches
    # v7x: keep >= 2 blocks on the "parallel" batch axis when the batch is large.
    if B8 // TB == 1 and TB >= 512:
        TB = _round_up(TB // 2, 8)
    B_pad = _round_up(B8, TB)

    vmem_limit = int(min(100 * 2**20, max(32 * 2**20, footprint(TB) + (4 << 20))))

    # ---- padded / lane-packed operands ------------------------------------
    def pad2(a, rows, cols):
        return jnp.pad(a, ((0, rows - a.shape[0]), (0, cols - a.shape[1])))

    # x / noise broadcast over GK (noise is randn_like(x), shape (B, I, 1) in torch).
    x_exp = pad2(jnp.repeat(x[:, :, 0], GK, axis=1), B_pad, C_pad)        # f = i*GK + j
    n1_exp = pad2(jnp.repeat(noise1[:, :, 0], GK, axis=1), B_pad, C_pad)
    n2_exp = pad2(jnp.repeat(noise2[:, :, 0], GK, axis=1), B_pad, C_pad)

    # Phase params (I, GK) flattened row-major to the same f = i*GK + j ordering;
    # std precomputed once as exp(0.5 * log_var).
    low = pad2(params["phase_low"].reshape(1, C), 1, C_pad)
    high = pad2(params["phase_height"].reshape(1, C), 1, C_pad)
    std_low = pad2(jnp.exp(0.5 * params["phase_low_log_var"]).reshape(1, C), 1, C_pad)
    std_high = pad2(jnp.exp(0.5 * params["phase_height_log_var"]).reshape(1, C), 1, C_pad)

    # phi_flat[b, f] pairs with conv_w.reshape(O, GK*I)[o, f]  (raw reshape semantics).
    w2d = params["conv_w"].reshape(O, C).T                                 # (C, O)
    w2d = jnp.pad(w2d, ((0, C_pad - C), (0, O_pad - O))).astype(matmul_dtype)
    bias = jnp.pad(params["conv_b"].reshape(1, O), ((0, 0), (0, O_pad - O)))

    grid = (B_pad // TB, O_pad // TO)

    kernel = functools.partial(_bayes_relukan_kernel, r=float(r), order=int(order),
                               matmul_dtype=matmul_dtype)

    out = pl.pallas_call(
        kernel,
        out_shape=jax.ShapeDtypeStruct((B_pad, O_pad), jnp.float32),
        grid_spec=pltpu.PrefetchScalarGridSpec(
            num_scalar_prefetch=0,
            grid=grid,
            in_specs=[
                pl.BlockSpec((TB, C_pad), lambda b, o: (b, 0)),      # x
                pl.BlockSpec((TB, C_pad), lambda b, o: (b, 0)),      # noise1
                pl.BlockSpec((TB, C_pad), lambda b, o: (b, 0)),      # noise2
                pl.BlockSpec((1, C_pad), lambda b, o: (0, 0)),       # phase_low
                pl.BlockSpec((1, C_pad), lambda b, o: (0, 0)),       # phase_height
                pl.BlockSpec((1, C_pad), lambda b, o: (0, 0)),       # std_low
                pl.BlockSpec((1, C_pad), lambda b, o: (0, 0)),       # std_high
                pl.BlockSpec((C_pad, TO), lambda b, o: (0, o)),      # weight
                pl.BlockSpec((1, TO), lambda b, o: (0, o)),          # bias
            ],
            out_specs=pl.BlockSpec((TB, TO), lambda b, o: (b, o)),
            scratch_shapes=[pltpu.VMEM((TB, C_pad), matmul_dtype)],  # cached phi
        ),
        compiler_params=pltpu.CompilerParams(
            # batch axis parallel (megacore); output axis arbitrary so the
            # @pl.when(o == 0) phi cache is never sharded away from its consumers.
            dimension_semantics=("parallel", "arbitrary"),
            vmem_limit_bytes=vmem_limit,
        ),
    )(x_exp, n1_exp, n2_exp, low, high, std_low, std_high, w2d, bias)

    return out[:B, :O][:, :, None]                      # (B, output_size, 1)


# ---------------------------------------------------------------------------
# Parameter init matching the PyTorch module constructor.
# ---------------------------------------------------------------------------
def init_params(key, input_size, g, k, output_size, imin=0.0, imax=1.0):
    gk = g + k
    k_lv1, k_lv2, k_w, k_b = jax.random.split(key, 4)

    row = (imax - imin) * jnp.arange(-k, g, dtype=jnp.float32) / g + imin   # (g+k,)
    phase_low = jnp.tile(row[None, :], (input_size, 1))                     # (I, GK)
    phase_height = phase_low + (k + 1) / g * (imax - imin)

    phase_low_log_var = -9.0 + 0.1 * jax.random.normal(k_lv1, (input_size, gk), jnp.float32)
    phase_height_log_var = -9.0 + 0.1 * jax.random.normal(k_lv2, (input_size, gk), jnp.float32)

    conv_w = 0.1 * jax.random.normal(k_w, (output_size, 1, gk, input_size), jnp.float32)
    conv_b = 0.01 * jax.random.normal(k_b, (output_size,), jnp.float32)

    return dict(phase_low=phase_low, phase_height=phase_height,
                phase_low_log_var=phase_low_log_var,
                phase_height_log_var=phase_height_log_var,
                conv_w=conv_w, conv_b=conv_b)


def reference_forward(x, noise1, noise2, params, *, g, k, output_size, r, order=1):
    """Pure-JAX replica of the PyTorch forward (multi_dim=False)."""
    B, I, _ = x.shape
    std_low = jnp.exp(0.5 * params["phase_low_log_var"])
    std_high = jnp.exp(0.5 * params["phase_height_log_var"])
    x1 = jnp.maximum(x - (params["phase_low"] + std_low * noise1), 0.0)
    x2 = jnp.maximum(params["phase_height"] + std_high * noise2 - x, 0.0)
    p = x1 * x2 * r
    phi = p if order == 1 else p ** order
    phi = phi * phi
    phi = phi.reshape(B, 1, g + k, I)                    # raw reshape, as in PyTorch
    out = jnp.einsum("bchw,ochw->bo", phi, params["conv_w"]) + params["conv_b"]
    return out[:, :, None]


if __name__ == "__main__":
    # Small, module-consistent shapes.
    B, input_size, g, k, output_size = 2, 8, 5, 3, 16
    imin, imax, order = 0.0, 1.0, 1
    r = 4.0 * g * g / ((k + 1) ** 2 * (imax - imin) ** 2)   # order == 1 branch

    key = jax.random.PRNGKey(0)
    k_par, k_x, k_n1, k_n2 = jax.random.split(key, 4)

    params = init_params(k_par, input_size, g, k, output_size, imin, imax)
    x = jax.random.uniform(k_x, (B, input_size, 1), jnp.float32, imin, imax)
    noise1 = jax.random.normal(k_n1, (B, input_size, 1), jnp.float32)  # randn_like(x)
    noise2 = jax.random.normal(k_n2, (B, input_size, 1), jnp.float32)

    ref = reference_forward(x, noise1, noise2, params,
                            g=g, k=k, output_size=output_size, r=r, order=order)
    ref = jax.block_until_ready(ref)

    # Tight check of the layout / flattening with an f32 MXU path.
    out_f32 = bayes_relukan_forward(x, noise1, noise2, params,
                                    g=g, k=k, output_size=output_size, r=r,
                                    order=order, matmul_dtype=jnp.float32)
    out_f32 = jax.block_until_ready(out_f32)
    assert out_f32.shape == (B, output_size, 1)
    assert jnp.allclose(out_f32, ref, atol=5e-4, rtol=5e-4), "f32 mismatch vs reference"

    # Default fast path: bf16 MXU inputs, f32 accumulate (looser tolerance for cast).
    out_bf16 = bayes_relukan_forward(x, noise1, noise2, params,
                                     g=g, k=k, output_size=output_size, r=r,
                                     order=order, matmul_dtype=jnp.bfloat16)
    out_bf16 = jax.block_until_ready(out_bf16)
    assert out_bf16.shape == (B, output_size, 1)
    assert jnp.allclose(out_bf16, ref, atol=2e-2, rtol=2e-2), "bf16 mismatch vs reference"

    print("KERNEL_OK")
</pallas_src>

<mosaic_0001>
module attributes {stable_mosaic.version = 11 : i64} {
  func.func @_bayes_relukan_kernel(%arg0: i32, %arg1: i32, %arg2: memref<8x128xf32, #tpu.memory_space<vmem>>, %arg3: memref<8x128xf32, #tpu.memory_space<vmem>>, %arg4: memref<8x128xf32, #tpu.memory_space<vmem>>, %arg5: memref<1x128xf32, #tpu.memory_space<vmem>>, %arg6: memref<1x128xf32, #tpu.memory_space<vmem>>, %arg7: memref<1x128xf32, #tpu.memory_space<vmem>>, %arg8: memref<1x128xf32, #tpu.memory_space<vmem>>, %arg9: memref<128x128xf32, #tpu.memory_space<vmem>>, %arg10: memref<1x128xf32, #tpu.memory_space<vmem>>, %arg11: memref<8x128xf32, #tpu.memory_space<vmem>>, %arg12: memref<8x128xf32, #tpu.memory_space<vmem>>) attributes {dimension_semantics = [#tpu.dimension_semantics<parallel>, #tpu.dimension_semantics<arbitrary>], iteration_bounds = array<i64: 1, 1>, scalar_prefetch = 0 : i64, scratch_operands = 1 : i64, tpu.core_type = #tpu.core_type<tc>, window_params = [{transform_indices = @transform_0, window_bounds = array<i64: 8, 128>}, {transform_indices = @transform_1, window_bounds = array<i64: 8, 128>}, {transform_indices = @transform_2, window_bounds = array<i64: 8, 128>}, {pipeline_mode = #tpu.pipeline_mode<synchronous>, transform_indices = @transform_3, window_bounds = array<i64: 1, 128>}, {pipeline_mode = #tpu.pipeline_mode<synchronous>, transform_indices = @transform_4, window_bounds = array<i64: 1, 128>}, {pipeline_mode = #tpu.pipeline_mode<synchronous>, transform_indices = @transform_5, window_bounds = array<i64: 1, 128>}, {pipeline_mode = #tpu.pipeline_mode<synchronous>, transform_indices = @transform_6, window_bounds = array<i64: 1, 128>}, {transform_indices = @transform_7, window_bounds = array<i64: 128, 128>}, {transform_indices = @transform_8, window_bounds = array<i64: 1, 128>}, {transform_indices = @transform_9, window_bounds = array<i64: 8, 128>}]} {
    %c0_i32 = arith.constant 0 : i32
    %0 = arith.cmpi eq, %arg1, %c0_i32 : i32
    %1 = arith.extui %0 : i1 to i32
    %c0_i32_0 = arith.constant 0 : i32
    %2 = arith.cmpi ne, %1, %c0_i32_0 : i32
    scf.if %2 {
      %c0_8 = arith.constant 0 : index
      %c0_9 = arith.constant 0 : index
      %10 = vector.load %arg2[%c0_8, %c0_9] : memref<8x128xf32, #tpu.memory_space<vmem>>, vector<8x128xf32>
      %c0_10 = arith.constant 0 : index
      %c0_11 = arith.constant 0 : index
      %11 = vector.load %arg5[%c0_10, %c0_11] : memref<1x128xf32, #tpu.memory_space<vmem>>, vector<1x128xf32>
      %c0_12 = arith.constant 0 : index
      %c0_13 = arith.constant 0 : index
      %12 = vector.load %arg7[%c0_12, %c0_13] : memref<1x128xf32, #tpu.memory_space<vmem>>, vector<1x128xf32>
      %c0_14 = arith.constant 0 : index
      %c0_15 = arith.constant 0 : index
      %13 = vector.load %arg3[%c0_14, %c0_15] : memref<8x128xf32, #tpu.memory_space<vmem>>, vector<8x128xf32>
      %14 = vector.broadcast %12 : vector<1x128xf32> to vector<8x128xf32>
      %15 = arith.mulf %14, %13 : vector<8x128xf32>
      %16 = vector.broadcast %11 : vector<1x128xf32> to vector<8x128xf32>
      %17 = arith.addf %16, %15 : vector<8x128xf32>
      %18 = arith.subf %10, %17 : vector<8x128xf32>
      %cst_16 = arith.constant 0.000000e+00 : f32
      %19 = vector.broadcast %cst_16 : f32 to vector<8x128xf32>
      %20 = arith.maximumf %18, %19 : vector<8x128xf32>
      %c0_17 = arith.constant 0 : index
      %c0_18 = arith.constant 0 : index
      %21 = vector.load %arg6[%c0_17, %c0_18] : memref<1x128xf32, #tpu.memory_space<vmem>>, vector<1x128xf32>
      %c0_19 = arith.constant 0 : index
      %c0_20 = arith.constant 0 : index
      %22 = vector.load %arg8[%c0_19, %c0_20] : memref<1x128xf32, #tpu.memory_space<vmem>>, vector<1x128xf32>
      %c0_21 = arith.constant 0 : index
      %c0_22 = arith.constant 0 : index
      %23 = vector.load %arg4[%c0_21, %c0_22] : memref<8x128xf32, #tpu.memory_space<vmem>>, vector<8x128xf32>
      %24 = vector.broadcast %22 : vector<1x128xf32> to vector<8x128xf32>
      %25 = arith.mulf %24, %23 : vector<8x128xf32>
      %26 = vector.broadcast %21 : vector<1x128xf32> to vector<8x128xf32>
      %27 = arith.addf %26, %25 : vector<8x128xf32>
      %28 = arith.subf %27, %10 : vector<8x128xf32>
      %cst_23 = arith.constant 0.000000e+00 : f32
      %29 = vector.broadcast %cst_23 : f32 to vector<8x128xf32>
      %30 = arith.maximumf %28, %29 : vector<8x128xf32>
      %31 = arith.mulf %20, %30 : vector<8x128xf32>
      %cst_24 = arith.constant 6.250000e+00 : f32
      %32 = vector.broadcast %cst_24 : f32 to vector<8x128xf32>
      %33 = arith.mulf %31, %32 : vector<8x128xf32>
      %34 = arith.mulf %33, %33 : vector<8x128xf32>
      %c0_25 = arith.constant 0 : index
      %c0_26 = arith.constant 0 : index
      %35 = vector.load %arg12[%c0_25, %c0_26] : memref<8x128xf32, #tpu.memory_space<vmem>>, vector<8x128xf32>
      tpu.vector_store %arg12[%c0_25, %c0_26], %34 {strides = array<i32>} : memref<8x128xf32, #tpu.memory_space<vmem>>, vector<8x128xf32>,
    } else {
    }
    %c0 = arith.constant 0 : index
    %c0_1 = arith.constant 0 : index
    %3 = vector.load %arg12[%c0, %c0_1] : memref<8x128xf32, #tpu.memory_space<vmem>>, vector<8x128xf32>
    %c0_2 = arith.constant 0 : index
    %c0_3 = arith.constant 0 : index
    %4 = vector.load %arg9[%c0_2, %c0_3] : memref<128x128xf32, #tpu.memory_space<vmem>>, vector<128x128xf32>
    %cst = arith.constant dense<0.000000e+00> : vector<8x128xf32>
    %5 = tpu.matmul %3, %4, %cst {dimension_numbers = #tpu.dot_dimension_numbers<[1], [0], [0], [1], [0, 0, 1, 1], [], []>} : vector<8x128xf32>, vector<128x128xf32>, vector<8x128xf32> -> vector<8x128xf32>
    %c0_4 = arith.constant 0 : index
    %c0_5 = arith.constant 0 : index
    %6 = vector.load %arg10[%c0_4, %c0_5] : memref<1x128xf32, #tpu.memory_space<vmem>>, vector<1x128xf32>
    %7 = vector.broadcast %6 : vector<1x128xf32> to vector<8x128xf32>
    %8 = arith.addf %5, %7 : vector<8x128xf32>
    %c0_6 = arith.constant 0 : index
    %c0_7 = arith.constant 0 : index
    %9 = vector.load %arg11[%c0_6, %c0_7] : memref<8x128xf32, #tpu.memory_space<vmem>>, vector<8x128xf32>
    tpu.vector_store %arg11[%c0_6, %c0_7], %8 {strides = array<i32>} : memref<8x128xf32, #tpu.memory_space<vmem>>, vector<8x128xf32>,
    return
  }
  func.func @transform_0(%arg0: i32, %arg1: i32) -> (i32, i32) {
    %c0_i32 = arith.constant 0 : i32
    %c0_i32_0 = arith.constant 0 : i32
    return %arg0, %c0_i32 : i32, i32
  }
  func.func @transform_1(%arg0: i32, %arg1: i32) -> (i32, i32) {
    %c0_i32 = arith.constant 0 : i32
    %c0_i32_0 = arith.constant 0 : i32
    return %arg0, %c0_i32 : i32, i32
  }
  func.func @transform_2(%arg0: i32, %arg1: i32) -> (i32, i32) {
    %c0_i32 = arith.constant 0 : i32
    %c0_i32_0 = arith.constant 0 : i32
    return %arg0, %c0_i32 : i32, i32
  }
  func.func @transform_3(%arg0: i32, %arg1: i32) -> (i32, i32) {
    %c0_i32 = arith.constant 0 : i32
    %c0_i32_0 = arith.constant 0 : i32
    %c0_i32_1 = arith.constant 0 : i32
    return %c0_i32, %c0_i32_0 : i32, i32
  }
  func.func @transform_4(%arg0: i32, %arg1: i32) -> (i32, i32) {
    %c0_i32 = arith.constant 0 : i32
    %c0_i32_0 = arith.constant 0 : i32
    %c0_i32_1 = arith.constant 0 : i32
    return %c0_i32, %c0_i32_0 : i32, i32
  }
  func.func @transform_5(%arg0: i32, %arg1: i32) -> (i32, i32) {
    %c0_i32 = arith.constant 0 : i32
    %c0_i32_0 = arith.constant 0 : i32
    %c0_i32_1 = arith.constant 0 : i32
    return %c0_i32, %c0_i32_0 : i32, i32
  }
  func.func @transform_6(%arg0: i32, %arg1: i32) -> (i32, i32) {
    %c0_i32 = arith.constant 0 : i32
    %c0_i32_0 = arith.constant 0 : i32
    %c0_i32_1 = arith.constant 0 : i32
    return %c0_i32, %c0_i32_0 : i32, i32
  }
  func.func @transform_7(%arg0: i32, %arg1: i32) -> (i32, i32) {
    %c0_i32 = arith.constant 0 : i32
    %c0_i32_0 = arith.constant 0 : i32
    return %c0_i32, %arg1 : i32, i32
  }
  func.func @transform_8(%arg0: i32, %arg1: i32) -> (i32, i32) {
    %c0_i32 = arith.constant 0 : i32
    %c0_i32_0 = arith.constant 0 : i32
    return %c0_i32, %arg1 : i32, i32
  }
  func.func @transform_9(%arg0: i32, %arg1: i32) -> (i32, i32) {
    %c0_i32 = arith.constant 0 : i32
    return %arg0, %arg1 : i32, i32
  }
}

</mosaic_0001>

<llo_original>
// kernel: tpu_custom_call.1
$region0: #{tpu_custom_call.1}
  #allocation0 [shape = 'u32[]', space=smem, size = 0x4, offset = 0x4, fixed_abs, tag = 'smem constant byte address 0x4 - core index']
  #allocation1 [shape = 'u32[144,128]{1,0:T(1,128)}', space=vmem, size = 0x12000, scoped, tag = 'internal scratch']
  #allocation2 [shape = 'f32[8,128]{1,0:T(8,128)}', space=vmem, size = 0x1000, scoped, tag = 'scratch operand']
  %s0 = inlined_call_operand.hbm [shape: f32[8,128], index: 0, kind: input, shape index: {}]
  %s1 = inlined_call_operand.hbm [shape: f32[8,128], index: 1, kind: input, shape index: {}]
  %s2 = inlined_call_operand.hbm [shape: f32[8,128], index: 2, kind: input, shape index: {}]
  %s3 = inlined_call_operand.vmem [shape: f32[1,128], index: 3, kind: input, shape index: {}]
  %s4 = inlined_call_operand.vmem [shape: f32[1,128], index: 4, kind: input, shape index: {}]
  %s5 = inlined_call_operand.vmem [shape: f32[1,128], index: 5, kind: input, shape index: {}]
  %s6 = inlined_call_operand.vmem [shape: f32[1,128], index: 6, kind: input, shape index: {}]
  %s7 = inlined_call_operand.hbm [shape: f32[128,128], index: 7, kind: input, shape index: {}]
  %s8 = inlined_call_operand.vmem [shape: f32[1,128], index: 8, kind: input, shape index: {}]
  %s9 = inlined_call_operand.hbm [shape: f32[8,128], index: 9, kind: output, shape index: {}]
  %s10 = sld [smem:[#allocation0]]
  $region66: #{tpu_custom_call.1} parent=0
    _
  %s12 = ssub.s32 1, %s10
  %s13 = scalar_select 0, %s12, %s10
  $region1: #{tpu_custom_call.1} parent=0
    #allocation3 [shape = 'u8[4096]{0}', space=vmem, size = 0x1000, scoped, tag = 'input window, operand 0, single buffered']
    #allocation4 [shape = 's32[1]{0}', space=sflag, size = 0x4, scoped, tag = 'scoped memory for tpu_custom_call.1']
    #allocation5 [shape = 's32[1]{0}', space=sflag, size = 0x4, scoped, tag = 'scoped memory for tpu_custom_call.1']
    #allocation6 [shape = 'u8[4096]{0}', space=vmem, size = 0x1000, scoped, tag = 'input window, operand 1, single buffered']
    #allocation7 [shape = 's32[1]{0}', space=sflag, size = 0x4, scoped, tag = 'scoped memory for tpu_custom_call.1']
    #allocation8 [shape = 'u8[4096]{0}', space=vmem, size = 0x1000, scoped, tag = 'input window, operand 2, single buffered']
    #allocation9 [shape = 'u8[65536]{0}', space=vmem, size = 0x10000, scoped, tag = 'input window, operand 7, single buffered']
    #allocation10 [shape = 's32[1]{0}', space=sflag, size = 0x4, scoped, tag = 'scoped memory for tpu_custom_call.1']
    #allocation11 [shape = 'u8[4096]{0}', space=vmem, size = 0x1000, scoped, tag = 'output window, operand 0, single buffered']
    %14 = vsyncpa [#allocation4], 0
    %15 = vsyncpa [#allocation7], 0
    %16 = vsyncpa [#allocation10], 0
    %17 = vsyncpa [#allocation5], 0
    // Predicated region
    $region2: #{tpu_custom_call.1} parent=1 // pred_check
      _
    $region3: #{tpu_custom_call.1} parent=1 // pred_check_branch
      %19 = sbr.rel (0) target = $region5
    $region4: #{tpu_custom_call.1} parent=1 // pred_region
      %s21 = ssub.s32 128, 128
      %22 = vsyncadd [#allocation4], %s21
      %s24 = sshll.u32 [#allocation3], 4
      %s25 = int_to_ptr.vmem [resolvable:$true] %s24
      %27 = dma.hbm_to_vmem [thread:$0]  %s0, 128, %s25, [#allocation4]
    $region5: #{tpu_custom_call.1} parent=1 // pred_fallthru
      _
    // Predicated region
    $region6: #{tpu_custom_call.1} parent=1 // pred_check
      _
    $region7: #{tpu_custom_call.1} parent=1 // pred_check_branch
      %29 = sbr.rel (0) target = $region9
    $region8: #{tpu_custom_call.1} parent=1 // pred_region
      %s31 = ssub.s32 128, 128
      %32 = vsyncadd [#allocation7], %s31
      %s34 = sshll.u32 [#allocation6], 4
      %s35 = int_to_ptr.vmem [resolvable:$true] %s34
      %37 = dma.hbm_to_vmem [thread:$0]  %s1, 128, %s35, [#allocation7]
    $region9: #{tpu_custom_call.1} parent=1 // pred_fallthru
      _
    // Predicated region
    $region10: #{tpu_custom_call.1} parent=1 // pred_check
      _
    $region11: #{tpu_custom_call.1} parent=1 // pred_check_branch
      %39 = sbr.rel (0) target = $region13
    $region12: #{tpu_custom_call.1} parent=1 // pred_region
      %s41 = ssub.s32 128, 128
      %42 = vsyncadd [#allocation7], %s41
      %s44 = sshll.u32 [#allocation8], 4
      %s45 = int_to_ptr.vmem [resolvable:$true] %s44
      %47 = dma.hbm_to_vmem [thread:$0]  %s2, 128, %s45, [#allocation7]
    $region13: #{tpu_custom_call.1} parent=1 // pred_fallthru
      _
    // Predicated region
    $region14: #{tpu_custom_call.1} parent=1 // pred_check
      _
    $region15: #{tpu_custom_call.1} parent=1 // pred_check_branch
      %49 = sbr.rel (0) target = $region17
    $region16: #{tpu_custom_call.1} parent=1 // pred_region
      _
    $region17: #{tpu_custom_call.1} parent=1 // pred_fallthru
      _
    // Predicated region
    $region18: #{tpu_custom_call.1} parent=1 // pred_check
      _
    $region19: #{tpu_custom_call.1} parent=1 // pred_check_branch
      %51 = sbr.rel (0) target = $region21
    $region20: #{tpu_custom_call.1} parent=1 // pred_region
      _
    $region21: #{tpu_custom_call.1} parent=1 // pred_fallthru
      _
    // Predicated region
    $region22: #{tpu_custom_call.1} parent=1 // pred_check
      _
    $region23: #{tpu_custom_call.1} parent=1 // pred_check_branch
      %53 = sbr.rel (0) target = $region25
    $region24: #{tpu_custom_call.1} parent=1 // pred_region
      _
    $region25: #{tpu_custom_call.1} parent=1 // pred_fallthru
      _
    // Predicated region
    $region26: #{tpu_custom_call.1} parent=1 // pred_check
      _
    $region27: #{tpu_custom_call.1} parent=1 // pred_check_branch
      %55 = sbr.rel (0) target = $region29
    $region28: #{tpu_custom_call.1} parent=1 // pred_region
      _
    $region29: #{tpu_custom_call.1} parent=1 // pred_fallthru
      _
    // Predicated region
    $region30: #{tpu_custom_call.1} parent=1 // pred_check
      _
    $region31: #{tpu_custom_call.1} parent=1 // pred_check_branch
      %57 = sbr.rel (0) target = $region33
    $region32: #{tpu_custom_call.1} parent=1 // pred_region
      %s59 = ssub.s32 2048, 2048
      %60 = vsyncadd [#allocation10], %s59
      %s61 = sshll.u32 [#allocation9], 4
      %s62 = int_to_ptr.vmem [resolvable:$true] %s61
      %67 = dma.hbm_to_vmem [thread:$0]  %s7, 2048, %s62, [#allocation10], 128, 128, 8
    $region33: #{tpu_custom_call.1} parent=1 // pred_fallthru
      _
    // Predicated region
    $region34: #{tpu_custom_call.1} parent=1 // pred_check
      _
    $region35: #{tpu_custom_call.1} parent=1 // pred_check_branch
      %69 = sbr.rel (0) target = $region37
    $region36: #{tpu_custom_call.1} parent=1 // pred_region
      _
    $region37: #{tpu_custom_call.1} parent=1 // pred_fallthru
      _
    // Predicated region
    $region38: #{tpu_custom_call.1} parent=1 // pred_check
      _
    $region39: #{tpu_custom_call.1} parent=1 // pred_check_branch
      %71 = sbr.rel (0) target = $region41
    $region40: #{tpu_custom_call.1} parent=1 // pred_region
      %72 = dma.done [#allocation4], 128
    $region41: #{tpu_custom_call.1} parent=1 // pred_fallthru
      _
    // Predicated region
    $region42: #{tpu_custom_call.1} parent=1 // pred_check
      _
    $region43: #{tpu_custom_call.1} parent=1 // pred_check_branch
      %74 = sbr.rel (0) target = $region45
    $region44: #{tpu_custom_call.1} parent=1 // pred_region
      %75 = dma.done [#allocation7], 128
    $region45: #{tpu_custom_call.1} parent=1 // pred_fallthru
      _
    // Predicated region
    $region46: #{tpu_custom_call.1} parent=1 // pred_check
      _
    $region47: #{tpu_custom_call.1} parent=1 // pred_check_branch
      %77 = sbr.rel (0) target = $region49
    $region48: #{tpu_custom_call.1} parent=1 // pred_region
      %78 = dma.done [#allocation7], 128
    $region49: #{tpu_custom_call.1} parent=1 // pred_fallthru
      _
    // Predicated region
    $region50: #{tpu_custom_call.1} parent=1 // pred_check
      _
    $region51: #{tpu_custom_call.1} parent=1 // pred_check_branch
      %80 = sbr.rel (0) target = $region53
    $region52: #{tpu_custom_call.1} parent=1 // pred_region
      %81 = dma.done [#allocation10], 2048
    $region53: #{tpu_custom_call.1} parent=1 // pred_fallthru
      _
    %p82 = scmp.eq.s32.totalorder 0, 0
    // Predicated region
    $region54: #{tpu_custom_call.1} parent=1 // pred_check
      %p83 = pneg %p82
    $region55: #{tpu_custom_call.1} parent=1 // pred_check_branch
      %85 = sbr.rel (%p83) target = $region57
    $region56: #{tpu_custom_call.1} parent=1 // pred_region
      %v86 = vld [vmem:[#allocation3] sm:$0xff]
      %v87 = vld [vmem:[%s3] sm:$0x1]
      %v88 = vld [vmem:[%s5] sm:$0x1]
      %v89 = vld [vmem:[#allocation6] sm:$0xff]
      %v91 = vlaneseq
      %v92 = vshrl.u32 %v91, 7
      %v93 = vsub.s32 0, %v92
      %v94 = vrot.slane %v88, %v93
      %v96 = vmul.f32 %v94, %v89
      %v98 = vlaneseq
      %v99 = vshrl.u32 %v98, 7
      %v100 = vsub.s32 0, %v99
      %v101 = vrot.slane %v87, %v100
      %v103 = vadd.f32 %v101, %v96
      %v104 = vsub.f32 %v86, %v103
      %v105 = vmax.f32 %v104, 0.0
      %v106 = vld [vmem:[%s4] sm:$0x1]
      %v107 = vld [vmem:[%s6] sm:$0x1]
      %v108 = vld [vmem:[#allocation8] sm:$0xff]
      %v110 = vlaneseq
      %v111 = vshrl.u32 %v110, 7
      %v112 = vsub.s32 0, %v111
      %v113 = vrot.slane %v107, %v112
      %v115 = vmul.f32 %v113, %v108
      %v117 = vlaneseq
      %v118 = vshrl.u32 %v117, 7
      %v119 = vsub.s32 0, %v118
      %v120 = vrot.slane %v106, %v119
      %v122 = vadd.f32 %v120, %v115
      %v123 = vsub.f32 %v122, %v86
      %v124 = vmax.f32 %v123, 0.0
      %v125 = vmul.f32 %v105, %v124
      %v126 = vmul.f32 %v125, 6.25
      %v127 = vmul.f32 %v126, %v126
      %128 = vst [vmem:[#allocation2] sm:$0xff] %v127
    $region57: #{tpu_custom_call.1} parent=1 // pred_fallthru
      _
    %v129 = vld [vmem:[#allocation2] sm:$0xff]
    %v130 = vld [vmem:[#allocation9] sm:$0xff]
    %v131 = vld [vmem:[#allocation9 + $0x8] sm:$0xff]
    %v132 = vld [vmem:[#allocation9 + $0x10] sm:$0xff]
    %v133 = vld [vmem:[#allocation9 + $0x18] sm:$0xff]
    %v134 = vld [vmem:[#allocation9 + $0x20] sm:$0xff]
    %v135 = vld [vmem:[#allocation9 + $0x28] sm:$0xff]
    %v136 = vld [vmem:[#allocation9 + $0x30] sm:$0xff]
    %v137 = vld [vmem:[#allocation9 + $0x38] sm:$0xff]
    %v138 = vld [vmem:[#allocation9 + $0x40] sm:$0xff]
    %v139 = vld [vmem:[#allocation9 + $0x48] sm:$0xff]
    %v140 = vld [vmem:[#allocation9 + $0x50] sm:$0xff]
    %v141 = vld [vmem:[#allocation9 + $0x58] sm:$0xff]
    %v142 = vld [vmem:[#allocation9 + $0x60] sm:$0xff]
    %v143 = vld [vmem:[#allocation9 + $0x68] sm:$0xff]
    %v144 = vld [vmem:[#allocation9 + $0x70] sm:$0xff]
    %v145 = vld [vmem:[#allocation9 + $0x78] sm:$0xff]
    %v146 = vld [vmem:[%s8] sm:$0x1]
    %v148 = vlaneseq
    %v149 = vshrl.u32 %v148, 7
    %v150 = vsub.s32 0, %v149
    %v151 = vrot.slane %v146, %v150
    %153 = vmatprep.subr.mxu0 0.0
    %154 = vmatpush1.msra.mxu0 %v130
    %155 = vmatprep.subr.mxu0 0.0
    %156 = vmatpush1.msra.mxu0 %v131
    %157 = vmatprep.subr.mxu0 0.0
    %158 = vmatpush1.msra.mxu0 %v132
    %159 = vmatprep.subr.mxu0 0.0
    %160 = vmatpush1.msra.mxu0 %v133
    %161 = vmatprep.subr.mxu0 0.0
    %162 = vmatpush1.msra.mxu0 %v134
    %163 = vmatprep.subr.mxu0 0.0
    %164 = vmatpush1.msra.mxu0 %v135
    %165 = vmatprep.subr.mxu0 0.0
    %166 = vmatpush1.msra.mxu0 %v136
    %167 = vmatprep.subr.mxu0 0.0
    %168 = vmatpush1.msra.mxu0 %v137
    %169 = vmatprep.subr.mxu0 0.0
    %170 = vmatpush1.msra.mxu0 %v138
    %171 = vmatprep.subr.mxu0 0.0
    %172 = vmatpush1.msra.mxu0 %v139
    %173 = vmatprep.subr.mxu0 0.0
    %174 = vmatpush1.msra.mxu0 %v140
    %175 = vmatprep.subr.mxu0 0.0
    %176 = vmatpush1.msra.mxu0 %v141
    %177 = vmatprep.subr.mxu0 0.0
    %178 = vmatpush1.msra.mxu0 %v142
    %179 = vmatprep.subr.mxu0 0.0
    %180 = vmatpush1.msra.mxu0 %v143
    %181 = vmatprep.subr.mxu0 0.0
    %182 = vmatpush1.msra.mxu0 %v144
    %183 = vmatprep.subr.mxu0 0.0
    %184 = vmatpush1.msra.mxu0 %v145
    %185 = vmatprep.subr.mxu0 0.0
    %186 = vmatpush1.msra.mxu0 0.0
    %187 = vmatprep.subr.mxu0 0.0
    %188 = vmatpush1.msra.mxu0 0.0
    %189 = vmatprep.subr.mxu0 0.0
    %190 = vmatpush1.msra.mxu0 0.0
    %191 = vmatprep.subr.mxu0 0.0
    %192 = vmatpush1.msra.mxu0 0.0
    %193 = vmatprep.subr.mxu0 0.0
    %194 = vmatpush1.msra.mxu0 0.0
    %195 = vmatprep.subr.mxu0 0.0
    %196 = vmatpush1.msra.mxu0 0.0
    %197 = vmatprep.subr.mxu0 0.0
    %198 = vmatpush1.msra.mxu0 0.0
    %199 = vmatprep.subr.mxu0 0.0
    %200 = vmatpush1.msra.mxu0 0.0
    %201 = vmatprep.subr.mxu0 0.0
    %202 = vmatpush1.msra.mxu0 0.0
    %203 = vmatprep.subr.mxu0 0.0
    %204 = vmatpush1.msra.mxu0 0.0
    %205 = vmatprep.subr.mxu0 0.0
    %206 = vmatpush1.msra.mxu0 0.0
    %207 = vmatprep.subr.mxu0 0.0
    %208 = vmatpush1.msra.mxu0 0.0
    %209 = vmatprep.subr.mxu0 0.0
    %210 = vmatpush1.msra.mxu0 0.0
    %211 = vmatprep.subr.mxu0 0.0
    %212 = vmatpush1.msra.mxu0 0.0
    %213 = vmatprep.subr.mxu0 0.0
    %214 = vmatpush1.msra.mxu0 0.0
    %215 = vmatprep.subr.mxu0 0.0
    %216 = vmatpush1.msra.mxu0 0.0
    %217 = vmatprep.mubr.f32.mxu0 0.0
    %218 = vmatmul.mubr.f32.gmra.mrb[0].mxu0 %v129
    %v219 = vpop.f32.mrb[0].mxu0
    %v220 = vadd.f32 %v151, %v219
    %v221 = vpop.f32.mrb[0].mxu0
    %222 = vdwg.mxu0
    %223 = vst [vmem:[#allocation11] sm:$0xff] %v220
    // Predicated region
    $region58: #{tpu_custom_call.1} parent=1 // pred_check
      _
    $region59: #{tpu_custom_call.1} parent=1 // pred_check_branch
      %225 = sbr.rel (0) target = $region61
    $region60: #{tpu_custom_call.1} parent=1 // pred_region
      %s227 = ssub.s32 128, 128
      %228 = vsyncadd [#allocation5], %s227
      %s230 = sshll.u32 [#allocation11], 4
      %s231 = int_to_ptr.vmem [resolvable:$true] %s230
      %233 = dma.vmem_to_hbm [thread:$0]  %s231, 128, %s9, [#allocation5]
    $region61: #{tpu_custom_call.1} parent=1 // pred_fallthru
      _
    // Predicated region
    $region62: #{tpu_custom_call.1} parent=1 // pred_check
      _
    $region63: #{tpu_custom_call.1} parent=1 // pred_check_branch
      %235 = sbr.rel (0) target = $region65
    $region64: #{tpu_custom_call.1} parent=1 // pred_region
      %236 = dma.done [#allocation5], 128
    $region65: #{tpu_custom_call.1} parent=1 // pred_fallthru
      _
    %237 = vsyncpa [#allocation4], 1
    %238 = vsyncpa [#allocation7], 1
    %239 = vsyncpa [#allocation10], 1
    %240 = vsyncpa [#allocation5], 1

</llo_original>
